<compile_context>
chip_gen: v6e
topology: v6e:2x2x1
jax: 0.10.0
libtpu: 0.0.40
codegen_flags: <defaults>
</compile_context>

<pallas_src>
import functools

import jax
import jax.numpy as jnp
from jax import lax
from jax.experimental import pallas as pl
from jax.experimental.pallas import tpu as pltpu


# --------------------------------------------------------------------------- #
# pltpu.roll direction probe (cached).  The conv taps need shifted[p] = x[p+s];
# the static rotation amounts are derived from this probe so the kernel is
# correct regardless of the rotate direction convention of the backend.
# --------------------------------------------------------------------------- #
_ROLL_SIGN = None


def _roll_direction_sign():
    """Returns +1 if pltpu.roll follows np.roll semantics, -1 otherwise."""
    global _ROLL_SIGN
    if _ROLL_SIGN is None:
        def probe(x_ref, o_ref):
            o_ref[...] = pltpu.roll(x_ref[...], shift=1, axis=1)

        x = jnp.tile(jnp.arange(128, dtype=jnp.float32)[None, :], (8, 1))
        out = pl.pallas_call(
            probe, out_shape=jax.ShapeDtypeStruct((8, 128), jnp.float32))(x)
        # np.roll semantics -> out[0,0] == 127 ; opposite direction -> 1.
        _ROLL_SIGN = 1 if float(out[0, 0]) == 127.0 else -1
    return _ROLL_SIGN


# --------------------------------------------------------------------------- #
# Kernel: full residual stack for one image, (C, H*W) layout.
# --------------------------------------------------------------------------- #
def residual_stack_kernel(x_ref, w1_ref, w2_ref, mask_ref, out_ref, *,
                          n_res_layers, shifts):
    """
    x_ref   : (C, HW)       f32  one image, NCHW spatial flattened (free reshape)
    w1_ref  : (9, Cres, C)  bf16 3x3 conv weights, tap-major (t = kh*3 + kw)
    w2_ref  : (C, Cres)     bf16 1x1 conv weights
    mask_ref: (9, HW)       f32  0/1 validity masks per tap (zero the halo)
    out_ref : (C, HW)       f32  output block; doubles as the residual carrier
    shifts  : static tuple of 9 lane-rotation amounts (None for the center tap)
    """
    C, HW = x_ref.shape
    Cres = w1_ref.shape[1]

    w1 = w1_ref[...]          # resident weights (bf16)
    w2 = w2_ref[...]
    masks = mask_ref[...]     # (9, HW) f32 0/1

    out_ref[...] = x_ref[...]                 # residual carrier in VMEM (f32)

    def layer(_, carry):
        x_cur = out_ref[...]                  # (C, HW) f32
        a = jnp.maximum(x_cur, 0.0)           # ReLU (VPU, f32)

        # conv3x3(pad=1):  hidden[r,p] = sum_t sum_c w1[t,r,c] * a[c, p + off_t]
        # 9 shifted MXU matmuls, f32 accumulation, N = HW (lane-dense).
        hidden = jnp.zeros((Cres, HW), jnp.float32)
        for t in range(9):
            if shifts[t] is None:             # center tap: no shift, no mask
                xs = a
            else:
                xs = pltpu.roll(a, shift=shifts[t], axis=1)   # XLU lane rotate
                xs = xs * masks[t:t + 1, :]                   # zero out-of-image
            hidden = hidden + jnp.dot(w1[t], xs.astype(jnp.bfloat16),
                                      preferred_element_type=jnp.float32)

        hidden = jnp.maximum(hidden, 0.0)                     # ReLU (f32)
        y = jnp.dot(w2, hidden.astype(jnp.bfloat16),
                    preferred_element_type=jnp.float32)       # 1x1 conv (C, HW)
        out_ref[...] = x_cur + y                              # residual add (f32)
        return carry

    # Same weights every layer (matches nn.ModuleList([layer] * n_res_layers)).
    lax.fori_loop(0, n_res_layers, layer, 0, unroll=True)

    out_ref[...] = jnp.maximum(out_ref[...], 0.0)             # final F.relu


# --------------------------------------------------------------------------- #
# Wrapper
# --------------------------------------------------------------------------- #
def residual_stack_forward(x_nchw, w1_oihw, w2_oihw, n_res_layers):
    """Pallas implementation of ResidualStack.forward.

    x_nchw : (N, C, H, W) float32
    w1_oihw: (Cres, C, 3, 3)  conv3x3 weight (PyTorch OIHW, bias=False)
    w2_oihw: (C, Cres, 1, 1)  conv1x1 weight (PyTorch OIHW, bias=False)
    Returns (N, C, H, W).  Requires in_channel == hidden_channel (residual add).
    """
    N, C, H, W = x_nchw.shape
    Cres = w1_oihw.shape[0]
    HW = H * W

    # NCHW -> (N, C, H*W): contiguous flatten, free (no transpose, no HBM pass).
    x = x_nchw.reshape(N, C, HW).astype(jnp.float32)

    # Repack weights once (shared across all layers):
    #   (Cres, C, 3, 3) -> (9, Cres, C) tap-major;  (C, Cres, 1, 1) -> (C, Cres)
    w1k = (jnp.transpose(w1_oihw, (2, 3, 0, 1))
           .reshape(9, Cres, C).astype(jnp.bfloat16))
    w2k = w2_oihw[:, :, 0, 0].astype(jnp.bfloat16)

    # Per-tap 0/1 validity masks over the flattened spatial axis and the static
    # lane-rotation amount realizing shifted[p] = x[p + dh*W + dw].
    sign = _roll_direction_sign()
    hh = jnp.arange(H, dtype=jnp.int32).reshape(H, 1)
    ww = jnp.arange(W, dtype=jnp.int32).reshape(1, W)
    mask_rows, shifts = [], []
    for kh in range(3):
        for kw in range(3):
            dh, dw = kh - 1, kw - 1
            valid = ((hh + dh >= 0) & (hh + dh < H) &
                     (ww + dw >= 0) & (ww + dw < W))
            mask_rows.append(valid.reshape(HW))
            s = dh * W + dw
            shifts.append(None if s == 0 else (-sign * s) % HW)
    mask_arr = jnp.stack(mask_rows).astype(jnp.float32)       # (9, HW)

    kernel = functools.partial(residual_stack_kernel,
                               n_res_layers=n_res_layers, shifts=tuple(shifts))

    # VMEM budget from actual buffers: double-buffered in/out image blocks +
    # resident weights/masks + headroom for the f32 accumulators; capped at
    # 64 MiB so the same config fits v7x's physical VMEM.
    blk_bytes = C * HW * 4
    resident_bytes = (9 * Cres * C + C * Cres) * 2 + 9 * HW * 4
    est = 4 * blk_bytes + 2 * resident_bytes + 8 * Cres * HW * 4
    vmem_limit = int(min(max(6 * est, 16 * 1024 * 1024), 64 * 1024 * 1024))

    out = pl.pallas_call(
        kernel,
        out_shape=jax.ShapeDtypeStruct((N, C, HW), jnp.float32),
        grid=(N,),
        in_specs=[
            pl.BlockSpec((None, C, HW), lambda n: (n, 0, 0)),  # one image / step
            pl.BlockSpec((9, Cres, C), lambda n: (0, 0, 0)),   # weights: resident
            pl.BlockSpec((C, Cres), lambda n: (0, 0)),
            pl.BlockSpec((9, HW), lambda n: (0, 0)),           # edge masks: resident
        ],
        out_specs=pl.BlockSpec((None, C, HW), lambda n: (n, 0, 0)),
        compiler_params=pltpu.CompilerParams(
            dimension_semantics=("parallel",),   # megacore on v7x; pipelined DMA elsewhere
            vmem_limit_bytes=vmem_limit,
        ),
    )(x, w1k, w2k, mask_arr)

    return out.reshape(N, C, H, W)               # free reshape back to NCHW


# --------------------------------------------------------------------------- #
# Pure-JAX reference (matches the PyTorch module)
# --------------------------------------------------------------------------- #
def residual_stack_ref(x_nchw, w1_oihw, w2_oihw, n_res_layers):
    dn = ("NCHW", "OIHW", "NCHW")
    x = x_nchw
    for _ in range(n_res_layers):
        h = jax.nn.relu(x)
        h = lax.conv_general_dilated(h, w1_oihw, (1, 1), "SAME",
                                     dimension_numbers=dn)
        h = jax.nn.relu(h)
        h = lax.conv_general_dilated(h, w2_oihw, (1, 1), "VALID",
                                     dimension_numbers=dn)
        x = x + h
    return jax.nn.relu(x)


if __name__ == "__main__":
    # Small shapes consistent with the module: in_channel == hidden_channel == 4,
    # res_hidden_channel = 8, n_res_layers = 2, spatial 16x16, batch 2.
    N, C, H, W = 2, 4, 16, 16
    CRES = 8
    N_RES_LAYERS = 2

    key = jax.random.PRNGKey(0)
    kx, kw1, kw2 = jax.random.split(key, 3)
    x = jax.random.normal(kx, (N, C, H, W), dtype=jnp.float32)
    # Deterministic synthetic weights (bias=False convs), shared across layers
    # exactly like nn.ModuleList([layer] * n_res_layers).
    w1 = 0.1 * jax.random.normal(kw1, (CRES, C, 3, 3), dtype=jnp.float32)
    w2 = 0.1 * jax.random.normal(kw2, (C, CRES, 1, 1), dtype=jnp.float32)

    out = jax.block_until_ready(residual_stack_forward(x, w1, w2, N_RES_LAYERS))
    ref = jax.block_until_ready(residual_stack_ref(x, w1, w2, N_RES_LAYERS))

    assert out.shape == (N, C, H, W)
    # Tolerance accounts for bf16 MXU operands (f32 accumulation) in the kernel.
    assert jnp.allclose(out, ref, rtol=2e-2, atol=2e-2), (
        "mismatch vs reference: max abs err = "
        f"{float(jnp.max(jnp.abs(out - ref)))}")

    print("KERNEL_OK")
</pallas_src>

<mosaic_0001>
module attributes {stable_mosaic.version = 11 : i64} {
  func.func @probe(%arg0: memref<8x128xf32, #tpu.memory_space<vmem>>, %arg1: memref<8x128xf32, #tpu.memory_space<vmem>>) attributes {dimension_semantics = [], scalar_prefetch = 0 : i64, scratch_operands = 0 : i64, tpu.core_type = #tpu.core_type<tc>} {
    %c0 = arith.constant 0 : index
    %c0_0 = arith.constant 0 : index
    %0 = vector.load %arg0[%c0, %c0_0] : memref<8x128xf32, #tpu.memory_space<vmem>>, vector<8x128xf32>
    %c1_i32 = arith.constant 1 : i32
    %1 = tpu.dynamic_rotate %0 by %c1_i32 dim 1 : vector<8x128xf32>, i32 -> vector<8x128xf32>
    %c0_1 = arith.constant 0 : index
    %c0_2 = arith.constant 0 : index
    %2 = vector.load %arg1[%c0_1, %c0_2] : memref<8x128xf32, #tpu.memory_space<vmem>>, vector<8x128xf32>
    tpu.vector_store %arg1[%c0_1, %c0_2], %1 {strides = array<i32>} : memref<8x128xf32, #tpu.memory_space<vmem>>, vector<8x128xf32>,
    return
  }
}

</mosaic_0001>

<llo_original>
// kernel: tpu_custom_call.1
$region0: #{tpu_custom_call.1}
  #allocation0 [shape = 'u32[]', space=smem, size = 0x4, offset = 0x4, fixed_abs, tag = 'smem constant byte address 0x4 - core index']
  #allocation1 [shape = 'u32[144,128]{1,0:T(1,128)}', space=vmem, size = 0x12000, scoped, tag = 'internal scratch']
  %s0 = inlined_call_operand.hbm [shape: f32[8,128], index: 0, kind: input, shape index: {}]
  %s1 = inlined_call_operand.hbm [shape: f32[8,128], index: 1, kind: output, shape index: {}]
  %s2 = sld [smem:[#allocation0]]
  $region18: #{tpu_custom_call.1} parent=0
    _
  %s4 = ssub.s32 1, %s2
  %s5 = scalar_select 0, %s4, %s2
  $region1: #{tpu_custom_call.1} parent=0
    #allocation2 [shape = 'u8[4096]{0}', space=vmem, size = 0x1000, scoped, tag = 'input window, operand 0, single buffered']
    #allocation3 [shape = 's32[1]{0}', space=sflag, size = 0x4, scoped, tag = 'scoped memory for tpu_custom_call.1']
    #allocation4 [shape = 's32[1]{0}', space=sflag, size = 0x4, scoped, tag = 'scoped memory for tpu_custom_call.1']
    #allocation5 [shape = 'u8[4096]{0}', space=vmem, size = 0x1000, scoped, tag = 'output window, operand 0, single buffered']
    %6 = vsyncpa [#allocation3], 0
    %7 = vsyncpa [#allocation4], 0
    // Predicated region
    $region2: #{tpu_custom_call.1} parent=1 // pred_check
      _
    $region3: #{tpu_custom_call.1} parent=1 // pred_check_branch
      %9 = sbr.rel (0) target = $region5
    $region4: #{tpu_custom_call.1} parent=1 // pred_region
      %s11 = ssub.s32 128, 128
      %12 = vsyncadd [#allocation3], %s11
      %s14 = sshll.u32 [#allocation2], 4
      %s15 = int_to_ptr.vmem [resolvable:$true] %s14
      %17 = dma.hbm_to_vmem [thread:$0]  %s0, 128, %s15, [#allocation3]
    $region5: #{tpu_custom_call.1} parent=1 // pred_fallthru
      _
    // Predicated region
    $region6: #{tpu_custom_call.1} parent=1 // pred_check
      _
    $region7: #{tpu_custom_call.1} parent=1 // pred_check_branch
      %19 = sbr.rel (0) target = $region9
    $region8: #{tpu_custom_call.1} parent=1 // pred_region
      %20 = dma.done [#allocation3], 128
    $region9: #{tpu_custom_call.1} parent=1 // pred_fallthru
      _
    %v21 = vld [vmem:[#allocation2] sm:$0xff]
    %22 = vrot.lane.b32.xlu0 %v21, 1
    %v23 = vpop.permute.xlu0 %22
    %24 = vst [vmem:[#allocation5] sm:$0xff] %v23
    // Predicated region
    $region10: #{tpu_custom_call.1} parent=1 // pred_check
      _
    $region11: #{tpu_custom_call.1} parent=1 // pred_check_branch
      %26 = sbr.rel (0) target = $region13
    $region12: #{tpu_custom_call.1} parent=1 // pred_region
      %s28 = ssub.s32 128, 128
      %29 = vsyncadd [#allocation4], %s28
      %s31 = sshll.u32 [#allocation5], 4
      %s32 = int_to_ptr.vmem [resolvable:$true] %s31
      %34 = dma.vmem_to_hbm [thread:$0]  %s32, 128, %s1, [#allocation4]
    $region13: #{tpu_custom_call.1} parent=1 // pred_fallthru
      _
    // Predicated region
    $region14: #{tpu_custom_call.1} parent=1 // pred_check
      _
    $region15: #{tpu_custom_call.1} parent=1 // pred_check_branch
      %36 = sbr.rel (0) target = $region17
    $region16: #{tpu_custom_call.1} parent=1 // pred_region
      %37 = dma.done [#allocation4], 128
    $region17: #{tpu_custom_call.1} parent=1 // pred_fallthru
      _
    %38 = vsyncpa [#allocation3], 1
    %39 = vsyncpa [#allocation4], 1

</llo_original>
